<compile_context>
chip_gen: v5e
topology: v5e:2x2
jax: 0.10.0
libtpu: 0.0.40
codegen_flags: <defaults>
</compile_context>

<pallas_src>
from functools import partial

import jax
import jax.numpy as jnp
import numpy as np
from jax.experimental import pallas as pl
from jax.experimental.pallas import tpu as pltpu

_LANES = 128  # TPU lane width; keep the output last dim lane-dense.


def _identity_kernel(x_ref, o_ref):
    # Pure pass-through of the current block.
    o_ref[...] = x_ref[...]


def identity(x: jax.Array) -> jax.Array:
    """nn.Identity forward: zero compute, zero HBM traffic — return x."""
    return x


@partial(jax.jit, donate_argnums=(0,))
def identity_materialized(x: jax.Array) -> jax.Array:
    """Pallas Identity that materializes an output.

    The output aliases the donated input buffer (input_output_aliases={0: 0}),
    and the copy (if XLA emits one at all) is tiled as large lane-dense
    (block_rows, 128) blocks on a 1-D 'parallel' grid.
    """
    orig_shape = x.shape
    total = x.size
    itemsize = jnp.dtype(x.dtype).itemsize
    # Minimal sublane multiple for this dtype (f32: 8, bf16: 16, int8: 32).
    sub = 8 if itemsize >= 4 else (32 // (itemsize * 8)) * 8

    rows = total // _LANES
    if total % _LANES == 0 and rows % sub == 0:
        x2 = x.reshape(rows, _LANES)
        # ~2 MiB blocks: 2x in + 2x out double buffers stay well under the
        # scoped-VMEM default on every generation (v5e 16 MiB, v6e/v7x 32 MiB).
        max_rows = max(sub, (2 * 1024 * 1024) // (_LANES * itemsize))
        block_rows = min(rows, max_rows)
        block_rows = max(sub, (block_rows // sub) * sub)
        grid = (pl.cdiv(rows, block_rows),)

        out = pl.pallas_call(
            _identity_kernel,
            out_shape=jax.ShapeDtypeStruct((rows, _LANES), x.dtype),
            grid_spec=pltpu.PrefetchScalarGridSpec(
                num_scalar_prefetch=0,
                grid=grid,
                in_specs=[pl.BlockSpec((block_rows, _LANES), lambda i: (i, 0))],
                out_specs=pl.BlockSpec((block_rows, _LANES), lambda i: (i, 0)),
            ),
            compiler_params=pltpu.CompilerParams(
                dimension_semantics=("parallel",),
            ),
            input_output_aliases={0: 0},
        )(x2)
        return out.reshape(orig_shape)

    # Fallback for shapes that do not flatten to lane-dense tiles:
    # a single full-extent block (always legal), still aliased to the input.
    x_flat = x.reshape(-1)
    out = pl.pallas_call(
        _identity_kernel,
        out_shape=jax.ShapeDtypeStruct(x_flat.shape, x.dtype),
        input_output_aliases={0: 0},
    )(x_flat)
    return out.reshape(orig_shape)


if __name__ == "__main__":
    key = jax.random.PRNGKey(0)
    x = jax.random.normal(key, (2, 4, 16, 16), dtype=jnp.float32)
    x_np = np.asarray(x)  # snapshot before the input buffer is donated

    # Fast path: Identity is a no-op, the wrapper returns its argument.
    y_fast = identity(x)
    assert y_fast is x

    # Materialized Pallas path (output aliases the donated input buffer).
    y = identity_materialized(x)
    jax.block_until_ready(y)

    assert y.shape == x_np.shape and y.dtype == x_np.dtype
    assert np.array_equal(np.asarray(y), x_np)
    print("KERNEL_OK")
</pallas_src>

<mosaic_0001>
module attributes {stable_mosaic.version = 11 : i64} {
  func.func @_identity_kernel(%arg0: i32, %arg1: memref<16x128xf32, #tpu.memory_space<vmem>>, %arg2: memref<16x128xf32, #tpu.memory_space<vmem>>) attributes {dimension_semantics = [#tpu.dimension_semantics<parallel>], iteration_bounds = array<i64: 1>, scalar_prefetch = 0 : i64, scratch_operands = 0 : i64, tpu.core_type = #tpu.core_type<tc>, window_params = [{transform_indices = @transform_0, window_bounds = array<i64: 16, 128>}, {transform_indices = @transform_1, window_bounds = array<i64: 16, 128>}]} {
    %c0 = arith.constant 0 : index
    %c0_0 = arith.constant 0 : index
    %0 = vector.load %arg1[%c0, %c0_0] : memref<16x128xf32, #tpu.memory_space<vmem>>, vector<16x128xf32>
    %c0_1 = arith.constant 0 : index
    %c0_2 = arith.constant 0 : index
    %1 = vector.load %arg2[%c0_1, %c0_2] : memref<16x128xf32, #tpu.memory_space<vmem>>, vector<16x128xf32>
    tpu.vector_store %arg2[%c0_1, %c0_2], %0 {strides = array<i32>} : memref<16x128xf32, #tpu.memory_space<vmem>>, vector<16x128xf32>,
    return
  }
  func.func @transform_0(%arg0: i32) -> (i32, i32) {
    %c0_i32 = arith.constant 0 : i32
    %c0_i32_0 = arith.constant 0 : i32
    return %arg0, %c0_i32 : i32, i32
  }
  func.func @transform_1(%arg0: i32) -> (i32, i32) {
    %c0_i32 = arith.constant 0 : i32
    %c0_i32_0 = arith.constant 0 : i32
    return %arg0, %c0_i32 : i32, i32
  }
}

</mosaic_0001>

<llo_original>
// kernel: identity_materialized.1
$region0: #{identity_materialized.1}
  #allocation0 [shape = 'u32[]', space=smem, size = 0x4, offset = 0x4, fixed_abs, tag = 'smem constant byte address 0x4 - core index']
  #allocation1 [shape = 'u32[72,128]{1,0:T(1,128)}', space=vmem, size = 0x9000, scoped, tag = 'internal scratch']
  %s0 = inlined_call_operand.vmem [shape: f32[16,128], index: 0, kind: input, shape index: {}, may-alias: {0,1}]
  %s1 = inlined_call_operand.vmem [shape: f32[16,128], index: 1, kind: output, shape index: {}, may-alias: {0,1}]
  %s2 = sld [smem:[#allocation0]]
  $region14: #{identity_materialized.1} parent=0
    _
  %s4 = ssub.s32 1, %s2
  %s5 = scalar_select 0, %s4, %s2
  // Predicated region
  $region2: #{identity_materialized.1} parent=0 // pred_check
    _
  $region3: #{identity_materialized.1} parent=0 // pred_check_branch
    %7 = sbr.rel (0) target = $region5
  $region4: #{identity_materialized.1} parent=0 // pred_region
    _
  $region5: #{identity_materialized.1} parent=0 // pred_fallthru
    _
  %v8 = vld [vmem:[%s0] sm:$0xff]
  %v9 = vld [vmem:[%s0 + $0x8] sm:$0xff]
  %10 = vst [vmem:[%s1] sm:$0xff] %v8
  %11 = vst [vmem:[%s1 + $0x8] sm:$0xff] %v9
  // Predicated region
  $region6: #{identity_materialized.1} parent=0 // pred_check
    _
  $region7: #{identity_materialized.1} parent=0 // pred_check_branch
    %13 = sbr.rel (0) target = $region9
  $region8: #{identity_materialized.1} parent=0 // pred_region
    _
  $region9: #{identity_materialized.1} parent=0 // pred_fallthru
    _
  // Predicated region
  $region10: #{identity_materialized.1} parent=0 // pred_check
    _
  $region11: #{identity_materialized.1} parent=0 // pred_check_branch
    %15 = sbr.rel (0) target = $region13
  $region12: #{identity_materialized.1} parent=0 // pred_region
    _
  $region13: #{identity_materialized.1} parent=0 // pred_fallthru
    _

</llo_original>
